<compile_context>
chip_gen: v6e
topology: v6e:2x2x1
jax: 0.10.0
libtpu: 0.0.40
codegen_flags: <defaults>
</compile_context>

<pallas_src>
import jax
import jax.numpy as jnp
from jax.experimental import pallas as pl
from jax.experimental.pallas import tpu as pltpu

HIDDEN = 256
OUT_LANES = 128  # packed output: lane0=value_1, lane1=adv_1, lane2=q1


def _dueling_kernel(sa_ref, wf1_ref, w2_ref, w4_ref, b24_ref, heads_ref,
                    hb_ref, out_ref):
    sa = sa_ref[...]                                    # [bb, S+A+1] f32

    # Fused first layer of both branches (biases folded into the last row of
    # wf1 via the trailing ones column of sa): one MXU dot -> [h1 | h3].
    h13 = jnp.dot(sa, wf1_ref[...], preferred_element_type=jnp.float32)
    h13 = jnp.maximum(h13, 0.0)
    h1 = h13[:, :HIDDEN]
    h3 = h13[:, HIDDEN:]

    # Second layer of each branch. Weights arrive as bf16 (half the HBM bytes
    # of the dominant operands); upcast on load, accumulate in f32.
    w2 = w2_ref[...].astype(jnp.float32)
    w4 = w4_ref[...].astype(jnp.float32)
    h2 = jnp.maximum(
        jnp.dot(h1, w2, preferred_element_type=jnp.float32) + b24_ref[0:1, :],
        0.0)
    h4 = jnp.maximum(
        jnp.dot(h3, w4, preferred_element_type=jnp.float32) + b24_ref[1:2, :],
        0.0)

    # N=1 heads: VPU multiply + XLU lane reduction instead of MXU matmuls
    # whose result would be 1 useful column out of 256.
    value_nb = jnp.sum(h2 * heads_ref[0:1, :], axis=-1, keepdims=True)  # [bb,1]
    adv_nb = jnp.sum(h4 * heads_ref[1:2, :], axis=-1, keepdims=True)    # [bb,1]
    q_nb = value_nb + adv_nb

    # Lane-dense packed output: lane0=value, lane1=adv, lane2=q.  The head
    # biases (bv, ba, bv+ba) live in hb_ref and are added as one vreg row.
    lane = jax.lax.broadcasted_iota(jnp.int32, out_ref.shape, 1)
    packed = jnp.where(lane == 0, value_nb,
                       jnp.where(lane == 1, adv_nb,
                                 jnp.where(lane == 2, q_nb, 0.0)))
    out_ref[...] = packed + hb_ref[...]


def dueling_critic_v2_forward(state, action, params, *, block_b=256):
    """Returns (value_1, adv_1, q1), each of shape [B, 1] float32."""
    wf1, w2_bf16, w4_bf16, b24, heads, head_bias = params
    B = state.shape[0]
    ones = jnp.ones((B, 1), dtype=jnp.float32)
    sa1 = jnp.concatenate(
        [state.astype(jnp.float32), action.astype(jnp.float32), ones], axis=1)
    sa_dim = sa1.shape[1]

    # One block at small batch; a "parallel" batch grid for large batches so
    # v7x's second TensorCore gets work.  Weight blocks keep the same block
    # index across the grid, so they are not re-DMA'd per step.
    if B <= block_b or B % block_b != 0:
        bb = B
    else:
        bb = block_b
    grid = (B // bb,)

    def full(shape):
        return pl.BlockSpec(shape, lambda i: (0, 0))

    packed = pl.pallas_call(
        _dueling_kernel,
        out_shape=jax.ShapeDtypeStruct((B, OUT_LANES), jnp.float32),
        grid=grid,
        in_specs=[
            pl.BlockSpec((bb, sa_dim), lambda i: (i, 0)),   # sa1
            full(wf1.shape),                                # fused layer-1 weight
            full(w2_bf16.shape),                            # l2 weight (bf16)
            full(w4_bf16.shape),                            # l4 weight (bf16)
            full(b24.shape),                                # [b2; b4]
            full(heads.shape),                              # [wv; wa]
            full(head_bias.shape),                          # [bv, ba, bv+ba, 0...]
        ],
        out_specs=pl.BlockSpec((bb, OUT_LANES), lambda i: (i, 0)),
        compiler_params=pltpu.CompilerParams(
            dimension_semantics=("parallel",)),
    )(sa1, wf1, w2_bf16, w4_bf16, b24, heads, head_bias)

    value = packed[:, 0:1]
    adv = packed[:, 1:2]
    q = packed[:, 2:3]
    return value, adv, q


def pack_params(w1, b1, w2, b2, wv, bv, w3, b3, w4, b4, wa, ba,
                num_inputs, num_actions):
    """Pack per-layer weights into the fused operand layout used by the kernel.

    Weight matrices are [in_features, out_features] (y = x @ W + b), i.e. the
    transpose of torch's Linear.weight; biases are 1-D [out_features].
    """
    S, A = num_inputs, num_actions
    w3s, w3a = w3[:S], w3[S:]
    wf1 = jnp.concatenate([
        jnp.concatenate([w1, w3s], axis=1),                              # [S, 512]
        jnp.concatenate([jnp.zeros((A, HIDDEN), jnp.float32), w3a], 1),  # [A, 512]
        jnp.concatenate([b1, b3], axis=0)[None, :],                      # [1, 512]
    ], axis=0)                                                           # [S+A+1, 512]

    b24 = jnp.stack([b2, b4], axis=0)                                    # [2, 256]
    heads = jnp.stack([wv[:, 0], wa[:, 0]], axis=0)                      # [2, 256]
    bv_s, ba_s = bv[0], ba[0]
    head_bias = jnp.zeros((1, OUT_LANES), jnp.float32)
    head_bias = head_bias.at[0, 0].set(bv_s)
    head_bias = head_bias.at[0, 1].set(ba_s)
    head_bias = head_bias.at[0, 2].set(bv_s + ba_s)

    return (wf1,
            w2.astype(jnp.bfloat16),
            w4.astype(jnp.bfloat16),
            b24, heads, head_bias)


def init_params(key, num_inputs, num_actions):
    """Deterministic synthetic parameters (same shapes as the torch module)."""
    ks = jax.random.split(key, 12)

    def lin(kw, kb, fan_in, fan_out):
        # Uniform(-1/sqrt(fan_in), 1/sqrt(fan_in)), like torch's Linear default.
        bound = 1.0 / jnp.sqrt(jnp.float32(fan_in))
        w = jax.random.uniform(kw, (fan_in, fan_out), jnp.float32, -bound, bound)
        b = jax.random.uniform(kb, (fan_out,), jnp.float32, -bound, bound)
        return w, b

    w1, b1 = lin(ks[0], ks[1], num_inputs, HIDDEN)                  # l1
    w2, b2 = lin(ks[2], ks[3], HIDDEN, HIDDEN)                      # l2
    wv, bv = lin(ks[4], ks[5], HIDDEN, 1)                           # lv_1
    w3, b3 = lin(ks[6], ks[7], num_inputs + num_actions, HIDDEN)    # l3
    w4, b4 = lin(ks[8], ks[9], HIDDEN, HIDDEN)                      # l4
    wa, ba = lin(ks[10], ks[11], HIDDEN, 1)                         # la_1
    return pack_params(w1, b1, w2, b2, wv, bv, w3, b3, w4, b4, wa, ba,
                       num_inputs, num_actions)


def reference_forward(state, action, params, num_inputs, num_actions):
    """Pure-JAX reference mirroring the torch module (with bf16-stored l2/l4)."""
    wf1, w2_bf16, w4_bf16, b24, heads, head_bias = params
    S, A = num_inputs, num_actions
    w1 = wf1[:S, :HIDDEN]
    w3s = wf1[:S, HIDDEN:]
    w3a = wf1[S:S + A, HIDDEN:]
    b1 = wf1[S + A, :HIDDEN]
    b3 = wf1[S + A, HIDDEN:]
    w2 = w2_bf16.astype(jnp.float32)
    w4 = w4_bf16.astype(jnp.float32)
    b2, b4 = b24[0], b24[1]
    wv, wa = heads[0], heads[1]
    bv, ba = head_bias[0, 0], head_bias[0, 1]

    h = jax.nn.relu(state @ w1 + b1)
    h = jax.nn.relu(h @ w2 + b2)
    value = h @ wv[:, None] + bv

    sa = jnp.concatenate([state, action], axis=1)
    w3 = jnp.concatenate([w3s, w3a], axis=0)
    g = jax.nn.relu(sa @ w3 + b3)
    g = jax.nn.relu(g @ w4 + b4)
    adv = g @ wa[:, None] + ba
    return value, adv, adv + value


if __name__ == "__main__":
    B, NUM_INPUTS, NUM_ACTIONS = 2, 17, 6

    key = jax.random.PRNGKey(0)
    k_s, k_a, k_p = jax.random.split(key, 3)
    state = jax.random.normal(k_s, (B, NUM_INPUTS), dtype=jnp.float32)
    action = jax.random.normal(k_a, (B, NUM_ACTIONS), dtype=jnp.float32)
    params = init_params(k_p, NUM_INPUTS, NUM_ACTIONS)

    fwd = jax.jit(dueling_critic_v2_forward)
    value, adv, q = jax.block_until_ready(fwd(state, action, params))

    v_ref, a_ref, q_ref = reference_forward(state, action, params,
                                            NUM_INPUTS, NUM_ACTIONS)
    assert value.shape == (B, 1) and adv.shape == (B, 1) and q.shape == (B, 1)
    assert jnp.allclose(value, v_ref, atol=2e-3, rtol=2e-3)
    assert jnp.allclose(adv, a_ref, atol=2e-3, rtol=2e-3)
    assert jnp.allclose(q, q_ref, atol=2e-3, rtol=2e-3)

    print("KERNEL_OK")
</pallas_src>

<mosaic_0001>
module attributes {stable_mosaic.version = 11 : i64} {
  func.func @_dueling_kernel(%arg0: i32, %arg1: memref<2x24xf32, #tpu.memory_space<vmem>>, %arg2: memref<24x512xf32, #tpu.memory_space<vmem>>, %arg3: memref<256x256xbf16, #tpu.memory_space<vmem>>, %arg4: memref<256x256xbf16, #tpu.memory_space<vmem>>, %arg5: memref<2x256xf32, #tpu.memory_space<vmem>>, %arg6: memref<2x256xf32, #tpu.memory_space<vmem>>, %arg7: memref<1x128xf32, #tpu.memory_space<vmem>>, %arg8: memref<2x128xf32, #tpu.memory_space<vmem>>) attributes {dimension_semantics = [#tpu.dimension_semantics<parallel>], iteration_bounds = array<i64: 1>, scalar_prefetch = 0 : i64, scratch_operands = 0 : i64, tpu.core_type = #tpu.core_type<tc>, window_params = [{transform_indices = @transform_0, window_bounds = array<i64: 2, 24>}, {pipeline_mode = #tpu.pipeline_mode<synchronous>, transform_indices = @transform_1, window_bounds = array<i64: 24, 512>}, {pipeline_mode = #tpu.pipeline_mode<synchronous>, transform_indices = @transform_2, window_bounds = array<i64: 256, 256>}, {pipeline_mode = #tpu.pipeline_mode<synchronous>, transform_indices = @transform_3, window_bounds = array<i64: 256, 256>}, {pipeline_mode = #tpu.pipeline_mode<synchronous>, transform_indices = @transform_4, window_bounds = array<i64: 2, 256>}, {pipeline_mode = #tpu.pipeline_mode<synchronous>, transform_indices = @transform_5, window_bounds = array<i64: 2, 256>}, {pipeline_mode = #tpu.pipeline_mode<synchronous>, transform_indices = @transform_6, window_bounds = array<i64: 1, 128>}, {transform_indices = @transform_7, window_bounds = array<i64: 2, 128>}]} {
    %c0 = arith.constant 0 : index
    %c0_0 = arith.constant 0 : index
    %0 = vector.load %arg1[%c0, %c0_0] : memref<2x24xf32, #tpu.memory_space<vmem>>, vector<2x24xf32>
    %c0_1 = arith.constant 0 : index
    %c0_2 = arith.constant 0 : index
    %1 = vector.load %arg2[%c0_1, %c0_2] : memref<24x512xf32, #tpu.memory_space<vmem>>, vector<24x512xf32>
    %cst = arith.constant dense<0.000000e+00> : vector<2x512xf32>
    %2 = tpu.matmul %0, %1, %cst {dimension_numbers = #tpu.dot_dimension_numbers<[1], [0], [0], [1], [0, 0, 1, 1], [], []>} : vector<2x24xf32>, vector<24x512xf32>, vector<2x512xf32> -> vector<2x512xf32>
    %cst_3 = arith.constant 0.000000e+00 : f32
    %3 = vector.broadcast %cst_3 : f32 to vector<2x512xf32>
    %4 = arith.maximumf %2, %3 : vector<2x512xf32>
    %5 = vector.extract_strided_slice %4 {offsets = [0, 0], sizes = [2, 256], strides = [1, 1]} : vector<2x512xf32> to vector<2x256xf32>
    %6 = vector.extract_strided_slice %4 {offsets = [0, 256], sizes = [2, 256], strides = [1, 1]} : vector<2x512xf32> to vector<2x256xf32>
    %c0_4 = arith.constant 0 : index
    %c0_5 = arith.constant 0 : index
    %7 = vector.load %arg3[%c0_4, %c0_5] : memref<256x256xbf16, #tpu.memory_space<vmem>>, vector<256x256xbf16>
    %8 = arith.extf %7 : vector<256x256xbf16> to vector<256x256xf32>
    %c0_6 = arith.constant 0 : index
    %c0_7 = arith.constant 0 : index
    %9 = vector.load %arg4[%c0_6, %c0_7] : memref<256x256xbf16, #tpu.memory_space<vmem>>, vector<256x256xbf16>
    %10 = arith.extf %9 : vector<256x256xbf16> to vector<256x256xf32>
    %cst_8 = arith.constant dense<0.000000e+00> : vector<2x256xf32>
    %11 = tpu.matmul %5, %8, %cst_8 {dimension_numbers = #tpu.dot_dimension_numbers<[1], [0], [0], [1], [0, 0, 1, 1], [], []>} : vector<2x256xf32>, vector<256x256xf32>, vector<2x256xf32> -> vector<2x256xf32>
    %c0_9 = arith.constant 0 : index
    %c0_10 = arith.constant 0 : index
    %12 = vector.load %arg5[%c0_9, %c0_10] : memref<2x256xf32, #tpu.memory_space<vmem>>, vector<1x256xf32>
    %13 = vector.broadcast %12 : vector<1x256xf32> to vector<2x256xf32>
    %14 = arith.addf %11, %13 : vector<2x256xf32>
    %cst_11 = arith.constant 0.000000e+00 : f32
    %15 = vector.broadcast %cst_11 : f32 to vector<2x256xf32>
    %16 = arith.maximumf %14, %15 : vector<2x256xf32>
    %cst_12 = arith.constant dense<0.000000e+00> : vector<2x256xf32>
    %17 = tpu.matmul %6, %10, %cst_12 {dimension_numbers = #tpu.dot_dimension_numbers<[1], [0], [0], [1], [0, 0, 1, 1], [], []>} : vector<2x256xf32>, vector<256x256xf32>, vector<2x256xf32> -> vector<2x256xf32>
    %c1 = arith.constant 1 : index
    %c0_13 = arith.constant 0 : index
    %18 = vector.load %arg5[%c1, %c0_13] : memref<2x256xf32, #tpu.memory_space<vmem>>, vector<1x256xf32>
    %19 = vector.broadcast %18 : vector<1x256xf32> to vector<2x256xf32>
    %20 = arith.addf %17, %19 : vector<2x256xf32>
    %cst_14 = arith.constant 0.000000e+00 : f32
    %21 = vector.broadcast %cst_14 : f32 to vector<2x256xf32>
    %22 = arith.maximumf %20, %21 : vector<2x256xf32>
    %c0_15 = arith.constant 0 : index
    %c0_16 = arith.constant 0 : index
    %23 = vector.load %arg6[%c0_15, %c0_16] : memref<2x256xf32, #tpu.memory_space<vmem>>, vector<1x256xf32>
    %24 = vector.broadcast %23 : vector<1x256xf32> to vector<2x256xf32>
    %25 = arith.mulf %16, %24 : vector<2x256xf32>
    %cst_17 = arith.constant dense<0.000000e+00> : vector<2xf32>
    %26 = vector.multi_reduction <add>, %25, %cst_17 [1] : vector<2x256xf32> to vector<2xf32>
    %27 = vector.shape_cast %26 : vector<2xf32> to vector<2x1xf32>
    %c1_18 = arith.constant 1 : index
    %c0_19 = arith.constant 0 : index
    %28 = vector.load %arg6[%c1_18, %c0_19] : memref<2x256xf32, #tpu.memory_space<vmem>>, vector<1x256xf32>
    %29 = vector.broadcast %28 : vector<1x256xf32> to vector<2x256xf32>
    %30 = arith.mulf %22, %29 : vector<2x256xf32>
    %cst_20 = arith.constant dense<0.000000e+00> : vector<2xf32>
    %31 = vector.multi_reduction <add>, %30, %cst_20 [1] : vector<2x256xf32> to vector<2xf32>
    %32 = vector.shape_cast %31 : vector<2xf32> to vector<2x1xf32>
    %33 = arith.addf %27, %32 : vector<2x1xf32>
    %34 = tpu.iota {dimensions = array<i32: 1>} : vector<2x128xi32>
    %c0_i32 = arith.constant 0 : i32
    %35 = vector.broadcast %c0_i32 : i32 to vector<2x128xi32>
    %36 = arith.cmpi eq, %34, %35 : vector<2x128xi32>
    %c1_i32 = arith.constant 1 : i32
    %37 = vector.broadcast %c1_i32 : i32 to vector<2x128xi32>
    %38 = arith.cmpi eq, %34, %37 : vector<2x128xi32>
    %c2_i32 = arith.constant 2 : i32
    %39 = vector.broadcast %c2_i32 : i32 to vector<2x128xi32>
    %40 = arith.cmpi eq, %34, %39 : vector<2x128xi32>
    %cst_21 = arith.constant 0.000000e+00 : f32
    %41 = vector.shape_cast %33 : vector<2x1xf32> to vector<2x1xf32>
    %42 = vector.broadcast %41 : vector<2x1xf32> to vector<2x128xf32>
    %43 = vector.broadcast %cst_21 : f32 to vector<2x128xf32>
    %44 = arith.select %40, %42, %43 : vector<2x128xi1>, vector<2x128xf32>
    %45 = vector.shape_cast %32 : vector<2x1xf32> to vector<2x1xf32>
    %46 = vector.broadcast %45 : vector<2x1xf32> to vector<2x128xf32>
    %47 = arith.select %38, %46, %44 : vector<2x128xi1>, vector<2x128xf32>
    %48 = vector.shape_cast %27 : vector<2x1xf32> to vector<2x1xf32>
    %49 = vector.broadcast %48 : vector<2x1xf32> to vector<2x128xf32>
    %50 = arith.select %36, %49, %47 : vector<2x128xi1>, vector<2x128xf32>
    %c0_22 = arith.constant 0 : index
    %c0_23 = arith.constant 0 : index
    %51 = vector.load %arg7[%c0_22, %c0_23] : memref<1x128xf32, #tpu.memory_space<vmem>>, vector<1x128xf32>
    %52 = vector.broadcast %51 : vector<1x128xf32> to vector<2x128xf32>
    %53 = arith.addf %50, %52 : vector<2x128xf32>
    %c0_24 = arith.constant 0 : index
    %c0_25 = arith.constant 0 : index
    %54 = vector.load %arg8[%c0_24, %c0_25] : memref<2x128xf32, #tpu.memory_space<vmem>>, vector<2x128xf32>
    tpu.vector_store %arg8[%c0_24, %c0_25], %53 {strides = array<i32>} : memref<2x128xf32, #tpu.memory_space<vmem>>, vector<2x128xf32>,
    return
  }
  func.func @transform_0(%arg0: i32) -> (i32, i32) {
    %c0_i32 = arith.constant 0 : i32
    %c0_i32_0 = arith.constant 0 : i32
    return %arg0, %c0_i32 : i32, i32
  }
  func.func @transform_1(%arg0: i32) -> (i32, i32) {
    %c0_i32 = arith.constant 0 : i32
    %c0_i32_0 = arith.constant 0 : i32
    %c0_i32_1 = arith.constant 0 : i32
    return %c0_i32, %c0_i32_0 : i32, i32
  }
  func.func @transform_2(%arg0: i32) -> (i32, i32) {
    %c0_i32 = arith.constant 0 : i32
    %c0_i32_0 = arith.constant 0 : i32
    %c0_i32_1 = arith.constant 0 : i32
    return %c0_i32, %c0_i32_0 : i32, i32
  }
  func.func @transform_3(%arg0: i32) -> (i32, i32) {
    %c0_i32 = arith.constant 0 : i32
    %c0_i32_0 = arith.constant 0 : i32
    %c0_i32_1 = arith.constant 0 : i32
    return %c0_i32, %c0_i32_0 : i32, i32
  }
  func.func @transform_4(%arg0: i32) -> (i32, i32) {
    %c0_i32 = arith.constant 0 : i32
    %c0_i32_0 = arith.constant 0 : i32
    %c0_i32_1 = arith.constant 0 : i32
    return %c0_i32, %c0_i32_0 : i32, i32
  }
  func.func @transform_5(%arg0: i32) -> (i32, i32) {
    %c0_i32 = arith.constant 0 : i32
    %c0_i32_0 = arith.constant 0 : i32
    %c0_i32_1 = arith.constant 0 : i32
    return %c0_i32, %c0_i32_0 : i32, i32
  }
  func.func @transform_6(%arg0: i32) -> (i32, i32) {
    %c0_i32 = arith.constant 0 : i32
    %c0_i32_0 = arith.constant 0 : i32
    %c0_i32_1 = arith.constant 0 : i32
    return %c0_i32, %c0_i32_0 : i32, i32
  }
  func.func @transform_7(%arg0: i32) -> (i32, i32) {
    %c0_i32 = arith.constant 0 : i32
    %c0_i32_0 = arith.constant 0 : i32
    return %arg0, %c0_i32 : i32, i32
  }
}

</mosaic_0001>

<llo_original>
// kernel: dueling_critic_v2_forward.1
$region0: #{dueling_critic_v2_forward.1}
  #allocation0 [shape = 'u32[]', space=smem, size = 0x4, offset = 0x4, fixed_abs, tag = 'smem constant byte address 0x4 - core index']
  #allocation1 [shape = 'u32[144,128]{1,0:T(1,128)}', space=vmem, size = 0x12000, scoped, tag = 'internal scratch']
  %s0 = inlined_call_operand.vmem [shape: f32[2,24], index: 0, kind: input, shape index: {}]
  %s1 = inlined_call_operand.hbm [shape: f32[24,512], index: 1, kind: input, shape index: {}]
  %s2 = inlined_call_operand.hbm [shape: bf16[256,256], index: 2, kind: input, shape index: {}]
  %s3 = inlined_call_operand.hbm [shape: bf16[256,256], index: 3, kind: input, shape index: {}]
  %s4 = inlined_call_operand.vmem [shape: f32[2,256], index: 4, kind: input, shape index: {}]
  %s5 = inlined_call_operand.vmem [shape: f32[2,256], index: 5, kind: input, shape index: {}]
  %s6 = inlined_call_operand.vmem [shape: f32[1,128], index: 6, kind: input, shape index: {}]
  %s7 = inlined_call_operand.vmem [shape: f32[2,128], index: 7, kind: output, shape index: {}]
  %s8 = sld [smem:[#allocation0]]
  $region50: #{dueling_critic_v2_forward.1} parent=0
    _
  %s10 = ssub.s32 1, %s8
  %s11 = scalar_select 0, %s10, %s8
  $region1: #{dueling_critic_v2_forward.1} parent=0
    #allocation2 [shape = 'u8[49152]{0}', space=vmem, size = 0xc000, scoped, tag = 'input window, operand 1, single buffered']
    #allocation3 [shape = 's32[1]{0}', space=sflag, size = 0x4, scoped, tag = 'scoped memory for dueling_critic_v2_forward.1']
    #allocation4 [shape = 'u8[131072]{0}', space=vmem, size = 0x20000, scoped, tag = 'input window, operand 2, single buffered']
    #allocation5 [shape = 's32[1]{0}', space=sflag, size = 0x4, scoped, tag = 'scoped memory for dueling_critic_v2_forward.1']
    #allocation6 [shape = 'u8[131072]{0}', space=vmem, size = 0x20000, scoped, tag = 'input window, operand 3, single buffered']
    %12 = vsyncpa [#allocation3], 0
    %13 = vsyncpa [#allocation5], 0
    // Predicated region
    $region2: #{dueling_critic_v2_forward.1} parent=1 // pred_check
      _
    $region3: #{dueling_critic_v2_forward.1} parent=1 // pred_check_branch
      %15 = sbr.rel (0) target = $region5
    $region4: #{dueling_critic_v2_forward.1} parent=1 // pred_region
      _
    $region5: #{dueling_critic_v2_forward.1} parent=1 // pred_fallthru
      _
    // Predicated region
    $region6: #{dueling_critic_v2_forward.1} parent=1 // pred_check
      _
    $region7: #{dueling_critic_v2_forward.1} parent=1 // pred_check_branch
      %17 = sbr.rel (0) target = $region9
    $region8: #{dueling_critic_v2_forward.1} parent=1 // pred_region
      %s19 = ssub.s32 1536, 1536
      %20 = vsyncadd [#allocation3], %s19
      %s21 = sshll.u32 [#allocation2], 4
      %s22 = int_to_ptr.vmem [resolvable:$true] %s21
      %27 = dma.hbm_to_vmem [thread:$0]  %s1, 1536, %s22, [#allocation3], 512, 512, 32
    $region9: #{dueling_critic_v2_forward.1} parent=1 // pred_fallthru
      _
    // Predicated region
    $region10: #{dueling_critic_v2_forward.1} parent=1 // pred_check
      _
    $region11: #{dueling_critic_v2_forward.1} parent=1 // pred_check_branch
      %29 = sbr.rel (0) target = $region13
    $region12: #{dueling_critic_v2_forward.1} parent=1 // pred_region
      %s31 = ssub.s32 4096, 4096
      %32 = vsyncadd [#allocation5], %s31
      %s33 = sshll.u32 [#allocation4], 4
      %s34 = int_to_ptr.vmem [resolvable:$true] %s33
      %39 = dma.hbm_to_vmem [thread:$0]  %s2, 4096, %s34, [#allocation5], 128, 128, 8
    $region13: #{dueling_critic_v2_forward.1} parent=1 // pred_fallthru
      _
    // Predicated region
    $region14: #{dueling_critic_v2_forward.1} parent=1 // pred_check
      _
    $region15: #{dueling_critic_v2_forward.1} parent=1 // pred_check_branch
      %41 = sbr.rel (0) target = $region17
    $region16: #{dueling_critic_v2_forward.1} parent=1 // pred_region
      %s43 = ssub.s32 4096, 4096
      %44 = vsyncadd [#allocation5], %s43
      %s45 = sshll.u32 [#allocation6], 4
      %s46 = int_to_ptr.vmem [resolvable:$true] %s45
      %51 = dma.hbm_to_vmem [thread:$0]  %s3, 4096, %s46, [#allocation5], 128, 128, 8
    $region17: #{dueling_critic_v2_forward.1} parent=1 // pred_fallthru
      _
    // Predicated region
    $region18: #{dueling_critic_v2_forward.1} parent=1 // pred_check
      _
    $region19: #{dueling_critic_v2_forward.1} parent=1 // pred_check_branch
      %53 = sbr.rel (0) target = $region21
    $region20: #{dueling_critic_v2_forward.1} parent=1 // pred_region
      _
    $region21: #{dueling_critic_v2_forward.1} parent=1 // pred_fallthru
      _
    // Predicated region
    $region22: #{dueling_critic_v2_forward.1} parent=1 // pred_check
      _
    $region23: #{dueling_critic_v2_forward.1} parent=1 // pred_check_branch
      %55 = sbr.rel (0) target = $region25
    $region24: #{dueling_critic_v2_forward.1} parent=1 // pred_region
      _
    $region25: #{dueling_critic_v2_forward.1} parent=1 // pred_fallthru
      _
    // Predicated region
    $region26: #{dueling_critic_v2_forward.1} parent=1 // pred_check
      _
    $region27: #{dueling_critic_v2_forward.1} parent=1 // pred_check_branch
      %57 = sbr.rel (0) target = $region29
    $region28: #{dueling_critic_v2_forward.1} parent=1 // pred_region
      _
    $region29: #{dueling_critic_v2_forward.1} parent=1 // pred_fallthru
      _
    // Predicated region
    $region30: #{dueling_critic_v2_forward.1} parent=1 // pred_check
      _
    $region31: #{dueling_critic_v2_forward.1} parent=1 // pred_check_branch
      %59 = sbr.rel (0) target = $region33
    $region32: #{dueling_critic_v2_forward.1} parent=1 // pred_region
      %60 = dma.done [#allocation3], 1536
    $region33: #{dueling_critic_v2_forward.1} parent=1 // pred_fallthru
      _
    // Predicated region
    $region34: #{dueling_critic_v2_forward.1} parent=1 // pred_check
      _
    $region35: #{dueling_critic_v2_forward.1} parent=1 // pred_check_branch
      %62 = sbr.rel (0) target = $region37
    $region36: #{dueling_critic_v2_forward.1} parent=1 // pred_region
      %63 = dma.done [#allocation5], 4096
    $region37: #{dueling_critic_v2_forward.1} parent=1 // pred_fallthru
      _
    // Predicated region
    $region38: #{dueling_critic_v2_forward.1} parent=1 // pred_check
      _
    $region39: #{dueling_critic_v2_forward.1} parent=1 // pred_check_branch
      %65 = sbr.rel (0) target = $region41
    $region40: #{dueling_critic_v2_forward.1} parent=1 // pred_region
      %66 = dma.done [#allocation5], 4096
    $region41: #{dueling_critic_v2_forward.1} parent=1 // pred_fallthru
      _
    %v67 = vld [vmem:[%s0] sm:$0x3]
    %v68 = vld [vmem:[#allocation2] sm:$0xff]
    %v69 = vld [vmem:[#allocation2 + $0x8] sm:$0xff]
    %v70 = vld [vmem:[#allocation2 + $0x10] sm:$0xff]
    %v71 = vld [vmem:[#allocation2 + $0x18] sm:$0xff]
    %v72 = vld [vmem:[#allocation2 + $0x20] sm:$0xff]
    %v73 = vld [vmem:[#allocation2 + $0x28] sm:$0xff]
    %v74 = vld [vmem:[#allocation2 + $0x30] sm:$0xff]
    %v75 = vld [vmem:[#allocation2 + $0x38] sm:$0xff]
    %v76 = vld [vmem:[#allocation2 + $0x40] sm:$0xff]
    %v77 = vld [vmem:[#allocation2 + $0x48] sm:$0xff]
    %v78 = vld [vmem:[#allocation2 + $0x50] sm:$0xff]
    %v79 = vld [vmem:[#allocation2 + $0x58] sm:$0xff]
    %vm80 = vcmask 195584
    %v82 = vsel %vm80, %v67, 0
    %84 = vmatprep.subr.mxu0 0.0
    %85 = vmatpush1.msra.mxu0 0.0
    %86 = vmatprep.subr.mxu0 0.0
    %87 = vmatpush1.msra.mxu0 0.0
    %88 = vmatprep.subr.mxu0 0.0
    %89 = vmatpush1.msra.mxu0 0.0
    %90 = vmatprep.subr.mxu0 0.0
    %91 = vmatpush1.msra.mxu0 0.0
    %92 = vmatprep.subr.mxu0 0.0
    %93 = vmatpush1.msra.mxu0 0.0
    %94 = vmatprep.subr.mxu0 0.0
    %95 = vmatpush1.msra.mxu0 0.0
    %96 = vmatprep.subr.mxu0 0.0
    %97 = vmatpush1.msra.mxu0 0.0
    %98 = vmatprep.subr.mxu0 0.0
    %99 = vmatpush1.msra.mxu0 0.0
    %100 = vmatprep.subr.mxu0 0.0
    %101 = vmatpush1.msra.mxu0 0.0
    %102 = vmatprep.subr.mxu0 0.0
    %103 = vmatpush1.msra.mxu0 0.0
    %104 = vmatprep.subr.mxu0 0.0
    %105 = vmatpush1.msra.mxu0 0.0
    %106 = vmatprep.subr.mxu0 0.0
    %107 = vmatpush1.msra.mxu0 0.0
    %108 = vmatprep.subr.mxu0 0.0
    %109 = vmatpush1.msra.mxu0 0.0
    %110 = vmatprep.subr.mxu0 %v77
    %111 = vmatpush1.msra.mxu0 %v76
    %112 = vmatprep.subr.mxu0 %v73
    %113 = vmatpush1.msra.mxu0 %v72
    %114 = vmatprep.subr.mxu0 %v69
    %115 = vmatpush1.msra.mxu0 %v68
    %116 = vmatprep.subr.mxu0 0.0
    %117 = vmatpush2.msra.mxu0 0.0
    %118 = vmatprep.subr.mxu0 0.0
    %119 = vmatpush2.msra.mxu0 0.0
    %120 = vmatprep.subr.mxu0 0.0
    %121 = vmatpush2.msra.mxu0 0.0
    %122 = vmatprep.subr.mxu0 0.0
    %123 = vmatpush2.msra.mxu0 0.0
    %124 = vmatprep.subr.mxu0 0.0
    %125 = vmatpush2.msra.mxu0 0.0
    %126 = vmatprep.subr.mxu0 0.0
    %127 = vmatpush2.msra.mxu0 0.0
    %128 = vmatprep.subr.mxu0 0.0
    %129 = vmatpush2.msra.mxu0 0.0
    %130 = vmatprep.subr.mxu0 0.0
    %131 = vmatpush2.msra.mxu0 0.0
    %132 = vmatprep.subr.mxu0 0.0
    %133 = vmatpush2.msra.mxu0 0.0
    %134 = vmatprep.subr.mxu0 0.0
    %135 = vmatpush2.msra.mxu0 0.0
    %136 = vmatprep.subr.mxu0 0.0
    %137 = vmatpush2.msra.mxu0 0.0
    %138 = vmatprep.subr.mxu0 0.0
    %139 = vmatpush2.msra.mxu0 0.0
    %140 = vmatprep.subr.mxu0 0.0
    %141 = vmatpush2.msra.mxu0 0.0
    %142 = vmatprep.subr.mxu0 0.0
    %143 = vmatpush2.msra.mxu0 0.0
    %144 = vmatprep.subr.mxu0 0.0
    %145 = vmatpush2.msra.mxu0 0.0
    %146 = vmatprep.subr.mxu0 0.0
    %147 = vmatpush2.msra.mxu0 0.0
    %148 = vmatprep.mubr.f32.mxu0 0.0
    %149 = vmatmul.mubr.f32.gmra.mxu0 %v82
    %v150 = vpop.f32.mrf.mxu0
    %v151 = vadd.f32 0.0, %v150
    %v152 = vpop.f32.mrf.mxu0
    %v153 = vadd.f32 0.0, %v152
    %154 = vdwg.mxu0
    %155 = vmatprep.subr.mxu0 0.0
    %156 = vmatpush1.msra.mxu0 0.0
    %157 = vmatprep.subr.mxu0 0.0
    %158 = vmatpush1.msra.mxu0 0.0
    %159 = vmatprep.subr.mxu0 0.0
    %160 = vmatpush1.msra.mxu0 0.0
    %161 = vmatprep.subr.mxu0 0.0
    %162 = vmatpush1.msra.mxu0 0.0
    %163 = vmatprep.subr.mxu0 0.0
    %164 = vmatpush1.msra.mxu0 0.0
    %165 = vmatprep.subr.mxu0 0.0
    %166 = vmatpush1.msra.mxu0 0.0
    %167 = vmatprep.subr.mxu0 0.0
    %168 = vmatpush1.msra.mxu0 0.0
    %169 = vmatprep.subr.mxu0 0.0
    %170 = vmatpush1.msra.mxu0 0.0
    %171 = vmatprep.subr.mxu0 0.0
    %172 = vmatpush1.msra.mxu0 0.0
    %173 = vmatprep.subr.mxu0 0.0
    %174 = vmatpush1.msra.mxu0 0.0
    %175 = vmatprep.subr.mxu0 0.0
    %176 = vmatpush1.msra.mxu0 0.0
    %177 = vmatprep.subr.mxu0 0.0
    %178 = vmatpush1.msra.mxu0 0.0
    %179 = vmatprep.subr.mxu0 0.0
    %180 = vmatpush1.msra.mxu0 0.0
    %181 = vmatprep.subr.mxu0 %v79
    %182 = vmatpush1.msra.mxu0 %v78
    %183 = vmatprep.subr.mxu0 %v75
    %184 = vmatpush1.msra.mxu0 %v74
    %185 = vmatprep.subr.mxu0 %v71
    %186 = vmatpush1.msra.mxu0 %v70
    %187 = vmatprep.subr.mxu0 0.0
    %188 = vmatpush2.msra.mxu0 0.0
    %189 = vmatprep.subr.mxu0 0.0
    %190 = vmatpush2.msra.mxu0 0.0
    %191 = vmatprep.subr.mxu0 0.0
    %192 = vmatpush2.msra.mxu0 0.0
    %193 = vmatprep.subr.mxu0 0.0
    %194 = vmatpush2.msra.mxu0 0.0
    %195 = vmatprep.subr.mxu0 0.0
    %196 = vmatpush2.msra.mxu0 0.0
    %197 = vmatprep.subr.mxu0 0.0
    %198 = vmatpush2.msra.mxu0 0.0
    %199 = vmatprep.subr.mxu0 0.0
    %200 = vmatpush2.msra.mxu0 0.0
    %201 = vmatprep.subr.mxu0 0.0
    %202 = vmatpush2.msra.mxu0 0.0
    %203 = vmatprep.subr.mxu0 0.0
    %204 = vmatpush2.msra.mxu0 0.0
    %205 = vmatprep.subr.mxu0 0.0
    %206 = vmatpush2.msra.mxu0 0.0
    %207 = vmatprep.subr.mxu0 0.0
    %208 = vmatpush2.msra.mxu0 0.0
    %209 = vmatprep.subr.mxu0 0.0
    %210 = vmatpush2.msra.mxu0 0.0
    %211 = vmatprep.subr.mxu0 0.0
    %212 = vmatpush2.msra.mxu0 0.0
    %213 = vmatprep.subr.mxu0 0.0
    %214 = vmatpush2.msra.mxu0 0.0
    %215 = vmatprep.subr.mxu0 0.0
    %216 = vmatpush2.msra.mxu0 0.0
    %217 = vmatprep.subr.mxu0 0.0
    %218 = vmatpush2.msra.mxu0 0.0
    %219 = vmatprep.mubr.f32.mxu0 0.0
    %220 = vmatmul.mubr.f32.gmra.mxu0 %v82
    %v221 = vpop.f32.mrf.mxu0
    %v222 = vadd.f32 0.0, %v221
    %v223 = vpop.f32.mrf.mxu0
    %v224 = vadd.f32 0.0, %v223
    %225 = vdwg.mxu0
    %v226 = vmax.f32 %v151, 0.0
    %v227 = vmax.f32 %v153, 0.0
    %v228 = vmax.f32 %v222, 0.0
    %v229 = vmax.f32 %v224, 0.0
    %v230 = vld [vmem:[#allocation4] sm:$0xff]
    %v231 = vld [vmem:[#allocation4 + $0x8] sm:$0xff]
    %v232 = vld [vmem:[#allocation4 + $0x10] sm:$0xff]
    %v233 = vld [vmem:[#allocation4 + $0x18] sm:$0xff]
    %v234 = vld [vmem:[#allocation4 + $0x20] sm:$0xff]
    %v235 = vld [vmem:[#allocation4 + $0x28] sm:$0xff]
    %v236 = vld [vmem:[#allocation4 + $0x30] sm:$0xff]
    %v237 = vld [vmem:[#allocation4 + $0x38] sm:$0xff]
    %v238 = vld [vmem:[#allocation4 + $0x40] sm:$0xff]
    %v239 = vld [vmem:[#allocation4 + $0x48] sm:$0xff]
    %v240 = vld [vmem:[#allocation4 + $0x50] sm:$0xff]
    %v241 = vld [vmem:[#allocation4 + $0x58] sm:$0xff]
    %v242 = vld [vmem:[#allocation4 + $0x60] sm:$0xff]
    %v243 = vld [vmem:[#allocation4 + $0x68] sm:$0xff]
    %v244 = vld [vmem:[#allocation4 + $0x70] sm:$0xff]
    %v245 = vld [vmem:[#allocation4 + $0x78] sm:$0xff]
    %v246 = vld [vmem:[#allocation4 + $0x80] sm:$0xff]
    %v247 = vld [vmem:[#allocation4 + $0x88] sm:$0xff]
    %v248 = vld [vmem:[#allocation4 + $0x90] sm:$0xff]
    %v249 = vld [vmem:[#allocation4 + $0x98] sm:$0xff]
    %v250 = vld [vmem:[#allocation4 + $0xa0] sm:$0xff]
    %v251 = vld [vmem:[#allocation4 + $0xa8] sm:$0xff]
    %v252 = vld [vmem:[#allocation4 + $0xb0] sm:$0xff]
    %v253 = vld [vmem:[#allocation4 + $0xb8] sm:$0xff]
    %v254 = vld [vmem:[#allocation4 + $0xc0] sm:$0xff]
    %v255 = vld [vmem:[#allocation4 + $0xc8] sm:$0xff]
    %v256 = vld [vmem:[#allocation4 + $0xd0] sm:$0xff]
    %v257 = vld [vmem:[#allocation4 + $0xd8] sm:$0xff]
    %v258 = vld [vmem:[#allocation4 + $0xe0] sm:$0xff]
    %v259 = vld [vmem:[#allocation4 + $0xe8] sm:$0xff]
    %v260 = vld [vmem:[#allocation4 + $0xf0] sm:$0xff]
    %v261 = vld [vmem:[#allocation4 + $0xf8] sm:$0xff]
    %v262 = vunpack.c.l.bf16 %v230
    %v263 = vunpack.c.h.bf16 %v230
    %v264 = vunpack.c.l.bf16 %v231
    %v265 = vunpack.c.h.bf16 %v231
    %v266 = vunpack.c.l.bf16 %v232
    %v267 = vunpack.c.h.bf16 %v232
    %v268 = vunpack.c.l.bf16 %v233
    %v269 = vunpack.c.h.bf16 %v233
    %v270 = vunpack.c.l.bf16 %v234
    %v271 = vunpack.c.h.bf16 %v234
    %v272 = vunpack.c.l.bf16 %v235
    %v273 = vunpack.c.h.bf16 %v235
    %v274 = vunpack.c.l.bf16 %v236
    %v275 = vunpack.c.h.bf16 %v236
    %v276 = vunpack.c.l.bf16 %v237
    %v277 = vunpack.c.h.bf16 %v237
    %v278 = vunpack.c.l.bf16 %v238
    %v279 = vunpack.c.h.bf16 %v238
    %v280 = vunpack.c.l.bf16 %v239
    %v281 = vunpack.c.h.bf16 %v239
    %v282 = vunpack.c.l.bf16 %v240
    %v283 = vunpack.c.h.bf16 %v240
    %v284 = vunpack.c.l.bf16 %v241
    %v285 = vunpack.c.h.bf16 %v241
    %v286 = vunpack.c.l.bf16 %v242
    %v287 = vunpack.c.h.bf16 %v242
    %v288 = vunpack.c.l.bf16 %v243
    %v289 = vunpack.c.h.bf16 %v243
    %v290 = vunpack.c.l.bf16 %v244
    %v291 = vunpack.c.h.bf16 %v244
    %v292 = vunpack.c.l.bf16 %v245
    %v293 = vunpack.c.h.bf16 %v245
    %v294 = vunpack.c.l.bf16 %v246
    %v295 = vunpack.c.h.bf16 %v246
    %v296 = vunpack.c.l.bf16 %v247
    %v297 = vunpack.c.h.bf16 %v247
    %v298 = vunpack.c.l.bf16 %v248
    %v299 = vunpack.c.h.bf16 %v248
    %v300 = vunpack.c.l.bf16 %v249
    %v301 = vunpack.c.h.bf16 %v249
    %v302 = vunpack.c.l.bf16 %v250
    %v303 = vunpack.c.h.bf16 %v250
    %v304 = vunpack.c.l.bf16 %v251
    %v305 = vunpack.c.h.bf16 %v251
    %v306 = vunpack.c.l.bf16 %v252
    %v307 = vunpack.c.h.bf16 %v252
    %v308 = vunpack.c.l.bf16 %v253
    %v309 = vunpack.c.h.bf16 %v253
    %v310 = vunpack.c.l.bf16 %v254
    %v311 = vunpack.c.h.bf16 %v254
    %v312 = vunpack.c.l.bf16 %v255
    %v313 = vunpack.c.h.bf16 %v255
    %v314 = vunpack.c.l.bf16 %v256
    %v315 = vunpack.c.h.bf16 %v256
    %v316 = vunpack.c.l.bf16 %v257
    %v317 = vunpack.c.h.bf16 %v257
    %v318 = vunpack.c.l.bf16 %v258
    %v319 = vunpack.c.h.bf16 %v258
    %v320 = vunpack.c.l.bf16 %v259
    %v321 = vunpack.c.h.bf16 %v259
    %v322 = vunpack.c.l.bf16 %v260
    %v323 = vunpack.c.h.bf16 %v260
    %v324 = vunpack.c.l.bf16 %v261
    %v325 = vunpack.c.h.bf16 %v261
    %v326 = vld [vmem:[#allocation6] sm:$0xff]
    %v327 = vld [vmem:[#allocation6 + $0x8] sm:$0xff]
    %v328 = vld [vmem:[#allocation6 + $0x10] sm:$0xff]
    %v329 = vld [vmem:[#allocation6 + $0x18] sm:$0xff]
    %v330 = vld [vmem:[#allocation6 + $0x20] sm:$0xff]
    %v331 = vld [vmem:[#allocation6 + $0x28] sm:$0xff]
    %v332 = vld [vmem:[#allocation6 + $0x30] sm:$0xff]
    %v333 = vld [vmem:[#allocation6 + $0x38] sm:$0xff]
    %v334 = vld [vmem:[#allocation6 + $0x40] sm:$0xff]
    %v335 = vld [vmem:[#allocation6 + $0x48] sm:$0xff]
    %v336 = vld [vmem:[#allocation6 + $0x50] sm:$0xff]
    %v337 = vld [vmem:[#allocation6 + $0x58] sm:$0xff]
    %v338 = vld [vmem:[#allocation6 + $0x60] sm:$0xff]
    %v339 = vld [vmem:[#allocation6 + $0x68] sm:$0xff]
    %v340 = vld [vmem:[#allocation6 + $0x70] sm:$0xff]
    %v341 = vld [vmem:[#allocation6 + $0x78] sm:$0xff]
    %v342 = vld [vmem:[#allocation6 + $0x80] sm:$0xff]
    %v343 = vld [vmem:[#allocation6 + $0x88] sm:$0xff]
    %v344 = vld [vmem:[#allocation6 + $0x90] sm:$0xff]
    %v345 = vld [vmem:[#allocation6 + $0x98] sm:$0xff]
    %v346 = vld [vmem:[#allocation6 + $0xa0] sm:$0xff]
    %v347 = vld [vmem:[#allocation6 + $0xa8] sm:$0xff]
    %v348 = vld [vmem:[#allocation6 + $0xb0] sm:$0xff]
    %v349 = vld [vmem:[#allocation6 + $0xb8] sm:$0xff]
    %v350 = vld [vmem:[#allocation6 + $0xc0] sm:$0xff]
    %v351 = vld [vmem:[#allocation6 + $0xc8] sm:$0xff]
    %v352 = vld [vmem:[#allocation6 + $0xd0] sm:$0xff]
    %v353 = vld [vmem:[#allocation6 + $0xd8] sm:$0xff]
    %v354 = vld [vmem:[#allocation6 + $0xe0] sm:$0xff]
    %v355 = vld [vmem:[#allocation6 + $0xe8] sm:$0xff]
    %v356 = vld [vmem:[#allocation6 + $0xf0] sm:$0xff]
    %v357 = vld [vmem:[#allocation6 + $0xf8] sm:$0xff]
    %v358 = vunpack.c.l.bf16 %v326
    %v359 = vunpack.c.h.bf16 %v326
    %v360 = vunpack.c.l.bf16 %v327
    %v361 = vunpack.c.h.bf16 %v327
    %v362 = vunpack.c.l.bf16 %v328
    %v363 = vunpack.c.h.bf16 %v328
    %v364 = vunpack.c.l.bf16 %v329
    %v365 = vunpack.c.h.bf16 %v329
    %v366 = vunpack.c.l.bf16 %v330
    %v367 = vunpack.c.h.bf16 %v330
    %v368 = vunpack.c.l.bf16 %v331
    %v369 = vunpack.c.h.bf16 %v331
    %v370 = vunpack.c.l.bf16 %v332
    %v371 = vunpack.c.h.bf16 %v332
    %v372 = vunpack.c.l.bf16 %v333
    %v373 = vunpack.c.h.bf16 %v333
    %v374 = vunpack.c.l.bf16 %v334
    %v375 = vunpack.c.h.bf16 %v334
    %v376 = vunpack.c.l.bf16 %v335
    %v377 = vunpack.c.h.bf16 %v335
    %v378 = vunpack.c.l.bf16 %v336
    %v379 = vunpack.c.h.bf16 %v336
    %v380 = vunpack.c.l.bf16 %v337
    %v381 = vunpack.c.h.bf16 %v337
    %v382 = vunpack.c.l.bf16 %v338
    %v383 = vunpack.c.h.bf16 %v338
    %v384 = vunpack.c.l.bf16 %v339
    %v385 = vunpack.c.h.bf16 %v339
    %v386 = vunpack.c.l.bf16 %v340
    %v387 = vunpack.c.h.bf16 %v340
    %v388 = vunpack.c.l.bf16 %v341
    %v389 = vunpack.c.h.bf16 %v341
    %v390 = vunpack.c.l.bf16 %v342
    %v391 = vunpack.c.h.bf16 %v342
    %v392 = vunpack.c.l.bf16 %v343
    %v393 = vunpack.c.h.bf16 %v343
    %v394 = vunpack.c.l.bf16 %v344
    %v395 = vunpack.c.h.bf16 %v344
    %v396 = vunpack.c.l.bf16 %v345
    %v397 = vunpack.c.h.bf16 %v345
    %v398 = vunpack.c.l.bf16 %v346
    %v399 = vunpack.c.h.bf16 %v346
    %v400 = vunpack.c.l.bf16 %v347
    %v401 = vunpack.c.h.bf16 %v347
    %v402 = vunpack.c.l.bf16 %v348
    %v403 = vunpack.c.h.bf16 %v348
    %v404 = vunpack.c.l.bf16 %v349
    %v405 = vunpack.c.h.bf16 %v349
    %v406 = vunpack.c.l.bf16 %v350
    %v407 = vunpack.c.h.bf16 %v350
    %v408 = vunpack.c.l.bf16 %v351
    %v409 = vunpack.c.h.bf16 %v351
    %v410 = vunpack.c.l.bf16 %v352
    %v411 = vunpack.c.h.bf16 %v352
    %v412 = vunpack.c.l.bf16 %v353
    %v413 = vunpack.c.h.bf16 %v353
    %v414 = vunpack.c.l.bf16 %v354
    %v415 = vunpack.c.h.bf16 %v354
    %v416 = vunpack.c.l.bf16 %v355
    %v417 = vunpack.c.h.bf16 %v355
    %v418 = vunpack.c.l.bf16 %v356
    %v419 = vunpack.c.h.bf16 %v356
    %v420 = vunpack.c.l.bf16 %v357
    %v421 = vunpack.c.h.bf16 %v357
    %v422 = vld [vmem:[%s4] ss:$2 sm:$0x3]
    %v424 = vlaneseq
    %v425 = vshrl.u32 %v424, 7
    %v426 = vsub.s32 0, %v425
    %v427 = vrot.slane %v422, %v426
    %v428 = vlaneseq
    %v429 = vshrl.u32 %v428, 7
    %v430 = vsub.s32 1, %v429
    %v431 = vrot.slane %v422, %v430
    %434 = vmatprep.subr.mxu0 %v293
    %435 = vmatpush1.msra.mxu0 %v292
    %436 = vmatprep.subr.mxu0 %v291
    %437 = vmatpush1.msra.mxu0 %v290
    %438 = vmatprep.subr.mxu0 %v289
    %439 = vmatpush1.msra.mxu0 %v288
    %440 = vmatprep.subr.mxu0 %v287
    %441 = vmatpush1.msra.mxu0 %v286
    %442 = vmatprep.subr.mxu0 %v285
    %443 = vmatpush1.msra.mxu0 %v284
    %444 = vmatprep.subr.mxu0 %v283
    %445 = vmatpush1.msra.mxu0 %v282
    %446 = vmatprep.subr.mxu0 %v281
    %447 = vmatpush1.msra.mxu0 %v280
    %448 = vmatprep.subr.mxu0 %v279
    %449 = vmatpush1.msra.mxu0 %v278
    %450 = vmatprep.subr.mxu0 %v277
    %451 = vmatpush1.msra.mxu0 %v276
    %452 = vmatprep.subr.mxu0 %v275
    %453 = vmatpush1.msra.mxu0 %v274
    %454 = vmatprep.subr.mxu0 %v273
    %455 = vmatpush1.msra.mxu0 %v272
    %456 = vmatprep.subr.mxu0 %v271
    %457 = vmatpush1.msra.mxu0 %v270
    %458 = vmatprep.subr.mxu0 %v269
    %459 = vmatpush1.msra.mxu0 %v268
    %460 = vmatprep.subr.mxu0 %v267
    %461 = vmatpush1.msra.mxu0 %v266
    %462 = vmatprep.subr.mxu0 %v265
    %463 = vmatpush1.msra.mxu0 %v264
    %464 = vmatprep.subr.mxu0 %v263
    %465 = vmatpush1.msra.mxu0 %v262
    %466 = vmatprep.subr.mxu0 %v325
    %467 = vmatpush2.msra.mxu0 %v324
    %468 = vmatprep.subr.mxu0 %v323
    %469 = vmatpush2.msra.mxu0 %v322
    %470 = vmatprep.subr.mxu0 %v321
    %471 = vmatpush2.msra.mxu0 %v320
    %472 = vmatprep.subr.mxu0 %v319
    %473 = vmatpush2.msra.mxu0 %v318
    %474 = vmatprep.subr.mxu0 %v317
    %475 = vmatpush2.msra.mxu0 %v316
    %476 = vmatprep.subr.mxu0 %v315
    %477 = vmatpush2.msra.mxu0 %v314
    %478 = vmatprep.subr.mxu0 %v313
    %479 = vmatpush2.msra.mxu0 %v312
    %480 = vmatprep.subr.mxu0 %v311
    %481 = vmatpush2.msra.mxu0 %v310
    %482 = vmatprep.subr.mxu0 %v309
    %483 = vmatpush2.msra.mxu0 %v308
    %484 = vmatprep.subr.mxu0 %v307
    %485 = vmatpush2.msra.mxu0 %v306
    %486 = vmatprep.subr.mxu0 %v305
    %487 = vmatpush2.msra.mxu0 %v304
    %488 = vmatprep.subr.mxu0 %v303
    %489 = vmatpush2.msra.mxu0 %v302
    %490 = vmatprep.subr.mxu0 %v301
    %491 = vmatpush2.msra.mxu0 %v300
    %492 = vmatprep.subr.mxu0 %v299
    %493 = vmatpush2.msra.mxu0 %v298
    %494 = vmatprep.subr.mxu0 %v297
    %495 = vmatpush2.msra.mxu0 %v296
    %496 = vmatprep.subr.mxu0 %v295
    %497 = vmatpush2.msra.mxu0 %v294
    %498 = vmatprep.mubr.f32.mxu0 %v227
    %499 = vmatmul.mubr.f32.gmra.mxu0 %v226
    %v500 = vpop.f32.mrf.mxu0
    %v501 = vadd.f32 %v427, %v500
    %v502 = vpop.f32.mrf.mxu0
    %v503 = vadd.f32 %v431, %v502
    %504 = vdwg.mxu0
    %v505 = vmax.f32 %v501, 0.0
    %v506 = vmax.f32 %v503, 0.0
    %s507 = scalar_lea.vmem %s4, 1
    %v508 = vld [vmem:[%s507] ss:$2 sm:$0x3]
    %v510 = vlaneseq
    %v511 = vshrl.u32 %v510, 7
    %v512 = vsub.s32 0, %v511
    %v513 = vrot.slane %v508, %v512
    %v514 = vlaneseq
    %v515 = vshrl.u32 %v514, 7
    %v516 = vsub.s32 1, %v515
    %v517 = vrot.slane %v508, %v516
    %520 = vmatprep.subr.mxu0 %v389
    %521 = vmatpush1.msra.mxu0 %v388
    %522 = vmatprep.subr.mxu0 %v387
    %523 = vmatpush1.msra.mxu0 %v386
    %524 = vmatprep.subr.mxu0 %v385
    %525 = vmatpush1.msra.mxu0 %v384
    %526 = vmatprep.subr.mxu0 %v383
    %527 = vmatpush1.msra.mxu0 %v382
    %528 = vmatprep.subr.mxu0 %v381
    %529 = vmatpush1.msra.mxu0 %v380
    %530 = vmatprep.subr.mxu0 %v379
    %531 = vmatpush1.msra.mxu0 %v378
    %532 = vmatprep.subr.mxu0 %v377
    %533 = vmatpush1.msra.mxu0 %v376
    %534 = vmatprep.subr.mxu0 %v375
    %535 = vmatpush1.msra.mxu0 %v374
    %536 = vmatprep.subr.mxu0 %v373
    %537 = vmatpush1.msra.mxu0 %v372
    %538 = vmatprep.subr.mxu0 %v371
    %539 = vmatpush1.msra.mxu0 %v370
    %540 = vmatprep.subr.mxu0 %v369
    %541 = vmatpush1.msra.mxu0 %v368
    %542 = vmatprep.subr.mxu0 %v367
    %543 = vmatpush1.msra.mxu0 %v366
    %544 = vmatprep.subr.mxu0 %v365
    %545 = vmatpush1.msra.mxu0 %v364
    %546 = vmatprep.subr.mxu0 %v363
    %547 = vmatpush1.msra.mxu0 %v362
    %548 = vmatprep.subr.mxu0 %v361
    %549 = vmatpush1.msra.mxu0 %v360
    %550 = vmatprep.subr.mxu0 %v359
    %551 = vmatpush1.msra.mxu0 %v358
    %552 = vmatprep.subr.mxu0 %v421
    %553 = vmatpush2.msra.mxu0 %v420
    %554 = vmatprep.subr.mxu0 %v419
    %555 = vmatpush2.msra.mxu0 %v418
    %556 = vmatprep.subr.mxu0 %v417
    %557 = vmatpush2.msra.mxu0 %v416
    %558 = vmatprep.subr.mxu0 %v415
    %559 = vmatpush2.msra.mxu0 %v414
    %560 = vmatprep.subr.mxu0 %v413
    %561 = vmatpush2.msra.mxu0 %v412
    %562 = vmatprep.subr.mxu0 %v411
    %563 = vmatpush2.msra.mxu0 %v410
    %564 = vmatprep.subr.mxu0 %v409
    %565 = vmatpush2.msra.mxu0 %v408
    %566 = vmatprep.subr.mxu0 %v407
    %567 = vmatpush2.msra.mxu0 %v406
    %568 = vmatprep.subr.mxu0 %v405
    %569 = vmatpush2.msra.mxu0 %v404
    %570 = vmatprep.subr.mxu0 %v403
    %571 = vmatpush2.msra.mxu0 %v402
    %572 = vmatprep.subr.mxu0 %v401
    %573 = vmatpush2.msra.mxu0 %v400
    %574 = vmatprep.subr.mxu0 %v399
    %575 = vmatpush2.msra.mxu0 %v398
    %576 = vmatprep.subr.mxu0 %v397
    %577 = vmatpush2.msra.mxu0 %v396
    %578 = vmatprep.subr.mxu0 %v395
    %579 = vmatpush2.msra.mxu0 %v394
    %580 = vmatprep.subr.mxu0 %v393
    %581 = vmatpush2.msra.mxu0 %v392
    %582 = vmatprep.subr.mxu0 %v391
    %583 = vmatpush2.msra.mxu0 %v390
    %584 = vmatprep.mubr.f32.mxu0 %v229
    %585 = vmatmul.mubr.f32.gmra.mxu0 %v228
    %v586 = vpop.f32.mrf.mxu0
    %v587 = vadd.f32 %v513, %v586
    %v588 = vpop.f32.mrf.mxu0
    %v589 = vadd.f32 %v517, %v588
    %590 = vdwg.mxu0
    %v591 = vmax.f32 %v587, 0.0
    %v592 = vmax.f32 %v589, 0.0
    %v593 = vld [vmem:[%s5] ss:$2 sm:$0x3]
    %v595 = vlaneseq
    %v596 = vshrl.u32 %v595, 7
    %v597 = vsub.s32 0, %v596
    %v598 = vrot.slane %v593, %v597
    %v599 = vlaneseq
    %v600 = vshrl.u32 %v599, 7
    %v601 = vsub.s32 1, %v600
    %v602 = vrot.slane %v593, %v601
    %v605 = vmul.f32 %v505, %v598
    %v606 = vmul.f32 %v506, %v602
    %vm607 = vcmask 1041408
    %v608 = vsel %vm607, %v605, 0.0
    %v609 = vsel %vm607, %v606, 0.0
    %v610 = vadd.f32 %v608, %v609
    %611 = vadd.xlane.f32.xlu0 %v610
    %v612 = vpop.xlane.xlu0 %611
    %s613 = scalar_lea.vmem %s5, 1
    %v614 = vld [vmem:[%s613] ss:$2 sm:$0x3]
    %v616 = vlaneseq
    %v617 = vshrl.u32 %v616, 7
    %v618 = vsub.s32 0, %v617
    %v619 = vrot.slane %v614, %v618
    %v620 = vlaneseq
    %v621 = vshrl.u32 %v620, 7
    %v622 = vsub.s32 1, %v621
    %v623 = vrot.slane %v614, %v622
    %v626 = vmul.f32 %v591, %v619
    %v627 = vmul.f32 %v592, %v623
    %v628 = vsel %vm607, %v626, 0.0
    %v629 = vsel %vm607, %v627, 0.0
    %v630 = vadd.f32 %v628, %v629
    %631 = vadd.xlane.f32.xlu0 %v630
    %v632 = vpop.xlane.xlu0 %631
    %v633 = vadd.f32 %v612, %v632
    %v634 = vlaneseq
    %v635 = vand.u32 %v634, 127
    %vm636 = vcmp.eq.s32.totalorder %v635, 0
    %vm637 = vcmp.eq.s32.totalorder %v635, 1
    %vm638 = vcmp.eq.s32.totalorder %v635, 2
    %v639 = vsel %vm638, %v633, 0.0
    %v640 = vsel %vm637, %v632, %v639
    %v641 = vsel %vm636, %v612, %v640
    %v642 = vld [vmem:[%s6] sm:$0x1]
    %v644 = vlaneseq
    %v645 = vshrl.u32 %v644, 7
    %v646 = vsub.s32 0, %v645
    %v647 = vrot.slane %v642, %v646
    %v649 = vadd.f32 %v641, %v647
    %650 = vst [vmem:[%s7] sm:$0x3] %v649
    // Predicated region
    $region42: #{dueling_critic_v2_forward.1} parent=1 // pred_check
      _
    $region43: #{dueling_critic_v2_forward.1} parent=1 // pred_check_branch
      %652 = sbr.rel (0) target = $region45
    $region44: #{dueling_critic_v2_forward.1} parent=1 // pred_region
      _
    $region45: #{dueling_critic_v2_forward.1} parent=1 // pred_fallthru
      _
    // Predicated region
    $region46: #{dueling_critic_v2_forward.1} parent=1 // pred_check
      _
    $region47: #{dueling_critic_v2_forward.1} parent=1 // pred_check_branch
      %654 = sbr.rel (0) target = $region49
    $region48: #{dueling_critic_v2_forward.1} parent=1 // pred_region
      _
    $region49: #{dueling_critic_v2_forward.1} parent=1 // pred_fallthru
      _
    %655 = vsyncpa [#allocation3], 1
    %656 = vsyncpa [#allocation5], 1

</llo_original>
